<compile_context>
chip_gen: v5e
topology: v5e:2x2
jax: 0.10.0
libtpu: 0.0.40
codegen_flags: <defaults>
</compile_context>

<pallas_src>
import jax
import jax.numpy as jnp
from jax.experimental import pallas as pl
from jax.experimental.pallas import tpu as pltpu

_LANE = 128


def _round_up(x, m):
    return (x + m - 1) // m * m


def ensemble_kernel(x1_ref, x2_ref, wb1t_ref, wb2t_ref, bb1_ref, bb2_ref,
                    sel_ref, wc_ref, bc_ref, out_ref, s1_ref, s2_ref):
    """Grid = (batch tiles [parallel], H*W chunks [arbitrary reduction])."""
    k = pl.program_id(1)

    # ---- init GAP-sum accumulators at the start of each reduction ----
    @pl.when(k == 0)
    def _init():
        s1_ref[...] = jnp.zeros_like(s1_ref)
        s2_ref[...] = jnp.zeros_like(s2_ref)

    # ---- streaming phase: accumulate raw spatial sums (XLU lane reduce) ----
    # 1/(H*W) is folded into wb*t host-side, so plain sums are enough.
    s1_ref[...] += jnp.sum(x1_ref[...], axis=-1, keepdims=True)
    s2_ref[...] += jnp.sum(x2_ref[...], axis=-1, keepdims=True)

    # ---- epilogue: backbone-stub projections + ensemble head + log-softmax ----
    @pl.when(k == pl.num_programs(1) - 1)
    def _head():
        # s*_ref: (bt*C, 1) per-(n, c) sums.  wb*t: (bt*C, 2) = tile(wb/HW, bt).
        # sel: (bt, bt*C) 0/1 matrix summing each batch element's C channel
        # rows, so  sel @ (s * wb_tiled) + bb  ==  GAP(x) @ wb + bb.
        l1 = jnp.dot(sel_ref[...], s1_ref[...] * wb1t_ref[...],
                     preferred_element_type=jnp.float32) + bb1_ref[...]
        l2 = jnp.dot(sel_ref[...], s2_ref[...] * wb2t_ref[...],
                     preferred_element_type=jnp.float32) + bb2_ref[...]

        # cat(dim=1) -> relu -> Linear(4, 2): pure VPU broadcast arithmetic.
        r1 = jnp.maximum(l1, 0.0)
        r2 = jnp.maximum(l2, 0.0)
        z = (r1[:, 0:1] * wc_ref[0:1, :] + r1[:, 1:2] * wc_ref[1:2, :]
             + r2[:, 0:1] * wc_ref[2:3, :] + r2[:, 1:2] * wc_ref[3:4, :]
             + bc_ref[...])

        # numerically-stable log-softmax over dim=1
        m = jnp.max(z, axis=-1, keepdims=True)
        e = jnp.exp(z - m)
        out_ref[...] = (z - m
                        - jnp.log(jnp.sum(e, axis=-1, keepdims=True))
                        ).astype(out_ref.dtype)


def my_ensemble_forward(x1, x2, params, *, hw_chunk=None, batch_tile=8):
    """x1, x2: (N, C, H, W) float32 NCHW images (matching the PyTorch module)."""
    wb1, bb1, wb2, bb2, w_cls, b_cls = params
    N, C, H, W = x1.shape
    HW = H * W

    # --- batch tile: whole batch if small, else a multiple of 8 (dense sublanes) ---
    if N <= batch_tile:
        bt, n_pad = N, N
    else:
        bt = _round_up(batch_tile, 8)
        n_pad = _round_up(N, bt)
    rows = bt * C

    # --- spatial chunk: multiple of 128 lanes; auto-size to ~2 MiB per input
    #     tile so (2 inputs x 2 pipeline buffers) stays well below scoped VMEM
    #     on every generation (v5e/v6e/v7x). ---
    hw128 = _round_up(HW, _LANE)
    if hw_chunk is None:
        hw_chunk = max(_LANE, (2 * 1024 * 1024) // (rows * 4))
    tk = min(_round_up(hw_chunk, _LANE), hw128)
    while rows * tk * 4 * 2 * 2 > 12 * 1024 * 1024 and tk > _LANE:
        tk = max(_LANE, _round_up(tk // 2, _LANE))
    hw_pad = _round_up(HW, tk)

    # --- dense 2-D (N*C, H*W) view (free for NCHW); zero-pad batch / spatial ---
    def prep(x):
        xr = x.reshape(N, C, HW).astype(jnp.float32)
        xr = jnp.pad(xr, ((0, n_pad - N), (0, 0), (0, hw_pad - HW)))
        return xr.reshape(n_pad * C, hw_pad)

    x1v, x2v = prep(x1), prep(x2)

    # --- host-side parameter prep: fold 1/(H*W) into wb, tile per batch-tile,
    #     build the per-batch channel-summation matrix ---
    inv_hw = jnp.float32(1.0 / HW)
    wb1t = jnp.tile(wb1.astype(jnp.float32) * inv_hw, (bt, 1))        # (bt*C, 2)
    wb2t = jnp.tile(wb2.astype(jnp.float32) * inv_hw, (bt, 1))        # (bt*C, 2)
    sel = (jnp.arange(bt)[:, None] == (jnp.arange(rows)[None, :] // C)
           ).astype(jnp.float32)                                       # (bt, bt*C)
    bb1r = bb1.reshape(1, 2).astype(jnp.float32)
    bb2r = bb2.reshape(1, 2).astype(jnp.float32)
    wc = w_cls.T.astype(jnp.float32)                                   # (4, 2)
    bc = b_cls.reshape(1, 2).astype(jnp.float32)

    grid = (n_pad // bt, hw_pad // tk)

    out = pl.pallas_call(
        ensemble_kernel,
        out_shape=jax.ShapeDtypeStruct((n_pad, 2), jnp.float32),
        grid_spec=pltpu.PrefetchScalarGridSpec(
            num_scalar_prefetch=0,
            grid=grid,
            in_specs=[
                pl.BlockSpec((rows, tk), lambda i, k: (i, k)),     # x1 tile
                pl.BlockSpec((rows, tk), lambda i, k: (i, k)),     # x2 tile
                pl.BlockSpec((rows, 2), lambda i, k: (0, 0)),      # wb1 (tiled, /HW)
                pl.BlockSpec((rows, 2), lambda i, k: (0, 0)),      # wb2 (tiled, /HW)
                pl.BlockSpec((1, 2), lambda i, k: (0, 0)),         # bb1
                pl.BlockSpec((1, 2), lambda i, k: (0, 0)),         # bb2
                pl.BlockSpec((bt, rows), lambda i, k: (0, 0)),     # channel-sum sel
                pl.BlockSpec((4, 2), lambda i, k: (0, 0)),         # classifier W.T
                pl.BlockSpec((1, 2), lambda i, k: (0, 0)),         # classifier bias
            ],
            out_specs=pl.BlockSpec((bt, 2), lambda i, k: (i, 0)),
            scratch_shapes=[pltpu.VMEM((rows, 1), jnp.float32),
                            pltpu.VMEM((rows, 1), jnp.float32)],
        ),
        compiler_params=pltpu.CompilerParams(
            dimension_semantics=("parallel", "arbitrary"),
            vmem_limit_bytes=32 * 1024 * 1024),
    )(x1v, x2v, wb1t, wb2t, bb1r, bb2r, sel, wc, bc)

    return out[:N]


def init_params(C):
    """Deterministic module-style params (stub backbones + classifier Linear(4,2))."""
    key = jax.random.PRNGKey(42)
    k = jax.random.split(key, 6)
    wb1 = jax.random.normal(k[0], (C, 2), jnp.float32) * 0.1    # backbone 1 stub
    bb1 = jax.random.normal(k[1], (2,), jnp.float32) * 0.1
    wb2 = jax.random.normal(k[2], (C, 2), jnp.float32) * 0.1    # backbone 2 stub
    bb2 = jax.random.normal(k[3], (2,), jnp.float32) * 0.1
    w_cls = jax.random.normal(k[4], (2, 4), jnp.float32) * 0.5  # nn.Linear(4, 2)
    b_cls = jax.random.normal(k[5], (2,), jnp.float32) * 0.5
    return (wb1, bb1, wb2, bb2, w_cls, b_cls)


def reference_forward(x1, x2, params):
    """Pure-JAX reference of the same semantics (for correctness checking)."""
    wb1, bb1, wb2, bb2, w_cls, b_cls = params
    N, C = x1.shape[:2]
    f1 = jnp.mean(x1.reshape(N, C, -1), axis=-1)
    f2 = jnp.mean(x2.reshape(N, C, -1), axis=-1)
    l1 = f1 @ wb1 + bb1
    l2 = f2 @ wb2 + bb2
    x = jnp.maximum(jnp.concatenate([l1, l2], axis=1), 0.0)
    z = x @ w_cls.T + b_cls
    return jax.nn.log_softmax(z, axis=1)


if __name__ == "__main__":
    # --- small shape matching the module call convention (two NCHW images) ---
    k1, k2 = jax.random.split(jax.random.PRNGKey(0))
    N, C, H, W = 2, 4, 16, 16
    x1 = jax.random.normal(k1, (N, C, H, W), jnp.float32)
    x2 = jax.random.normal(k2, (N, C, H, W), jnp.float32)
    params = init_params(C)

    out = jax.block_until_ready(my_ensemble_forward(x1, x2, params))
    ref = reference_forward(x1, x2, params)
    assert out.shape == (N, 2)
    assert bool(jnp.allclose(out, ref, atol=1e-4, rtol=1e-4)), (out, ref)

    # --- second shape exercising batch tiling, H*W chunking and padding ---
    k3, k4 = jax.random.split(jax.random.PRNGKey(1))
    N2, C2, H2, W2 = 10, 3, 24, 24
    y1 = jax.random.normal(k3, (N2, C2, H2, W2), jnp.float32)
    y2 = jax.random.normal(k4, (N2, C2, H2, W2), jnp.float32)
    params2 = init_params(C2)
    out2 = jax.block_until_ready(
        my_ensemble_forward(y1, y2, params2, hw_chunk=256, batch_tile=8))
    ref2 = reference_forward(y1, y2, params2)
    assert out2.shape == (N2, 2)
    assert bool(jnp.allclose(out2, ref2, atol=1e-4, rtol=1e-4)), (out2, ref2)

    print("KERNEL_OK")
</pallas_src>

<mosaic_0001>
module attributes {stable_mosaic.version = 11 : i64} {
  func.func @ensemble_kernel(%arg0: i32, %arg1: i32, %arg2: memref<8x256xf32, #tpu.memory_space<vmem>>, %arg3: memref<8x256xf32, #tpu.memory_space<vmem>>, %arg4: memref<8x2xf32, #tpu.memory_space<vmem>>, %arg5: memref<8x2xf32, #tpu.memory_space<vmem>>, %arg6: memref<1x2xf32, #tpu.memory_space<vmem>>, %arg7: memref<1x2xf32, #tpu.memory_space<vmem>>, %arg8: memref<2x8xf32, #tpu.memory_space<vmem>>, %arg9: memref<4x2xf32, #tpu.memory_space<vmem>>, %arg10: memref<1x2xf32, #tpu.memory_space<vmem>>, %arg11: memref<2x2xf32, #tpu.memory_space<vmem>>, %arg12: memref<8x1xf32, #tpu.memory_space<vmem>>, %arg13: memref<8x1xf32, #tpu.memory_space<vmem>>) attributes {dimension_semantics = [#tpu.dimension_semantics<parallel>, #tpu.dimension_semantics<arbitrary>], iteration_bounds = array<i64: 1, 1>, scalar_prefetch = 0 : i64, scratch_operands = 2 : i64, tpu.core_type = #tpu.core_type<tc>, window_params = [{transform_indices = @transform_0, window_bounds = array<i64: 8, 256>}, {transform_indices = @transform_1, window_bounds = array<i64: 8, 256>}, {pipeline_mode = #tpu.pipeline_mode<synchronous>, transform_indices = @transform_2, window_bounds = array<i64: 8, 2>}, {pipeline_mode = #tpu.pipeline_mode<synchronous>, transform_indices = @transform_3, window_bounds = array<i64: 8, 2>}, {pipeline_mode = #tpu.pipeline_mode<synchronous>, transform_indices = @transform_4, window_bounds = array<i64: 1, 2>}, {pipeline_mode = #tpu.pipeline_mode<synchronous>, transform_indices = @transform_5, window_bounds = array<i64: 1, 2>}, {pipeline_mode = #tpu.pipeline_mode<synchronous>, transform_indices = @transform_6, window_bounds = array<i64: 2, 8>}, {pipeline_mode = #tpu.pipeline_mode<synchronous>, transform_indices = @transform_7, window_bounds = array<i64: 4, 2>}, {pipeline_mode = #tpu.pipeline_mode<synchronous>, transform_indices = @transform_8, window_bounds = array<i64: 1, 2>}, {transform_indices = @transform_9, window_bounds = array<i64: 2, 2>}]} {
    %c0_i32 = arith.constant 0 : i32
    %0 = arith.cmpi eq, %arg1, %c0_i32 : i32
    %1 = arith.extui %0 : i1 to i32
    %c0_i32_0 = arith.constant 0 : i32
    %2 = arith.cmpi ne, %1, %c0_i32_0 : i32
    scf.if %2 {
      %cst_15 = arith.constant 0.000000e+00 : f32
      %18 = vector.broadcast %cst_15 : f32 to vector<8x1xf32>
      %c0_16 = arith.constant 0 : index
      %c0_17 = arith.constant 0 : index
      %19 = vector.load %arg12[%c0_16, %c0_17] : memref<8x1xf32, #tpu.memory_space<vmem>>, vector<8x1xf32>
      tpu.vector_store %arg12[%c0_16, %c0_17], %18 {strides = array<i32>} : memref<8x1xf32, #tpu.memory_space<vmem>>, vector<8x1xf32>,
      %cst_18 = arith.constant 0.000000e+00 : f32
      %20 = vector.broadcast %cst_18 : f32 to vector<8x1xf32>
      %c0_19 = arith.constant 0 : index
      %c0_20 = arith.constant 0 : index
      %21 = vector.load %arg13[%c0_19, %c0_20] : memref<8x1xf32, #tpu.memory_space<vmem>>, vector<8x1xf32>
      tpu.vector_store %arg13[%c0_19, %c0_20], %20 {strides = array<i32>} : memref<8x1xf32, #tpu.memory_space<vmem>>, vector<8x1xf32>,
    } else {
    }
    %c0 = arith.constant 0 : index
    %c0_1 = arith.constant 0 : index
    %3 = vector.load %arg12[%c0, %c0_1] : memref<8x1xf32, #tpu.memory_space<vmem>>, vector<8x1xf32>
    %c0_2 = arith.constant 0 : index
    %c0_3 = arith.constant 0 : index
    %4 = vector.load %arg2[%c0_2, %c0_3] : memref<8x256xf32, #tpu.memory_space<vmem>>, vector<8x256xf32>
    %cst = arith.constant dense<0.000000e+00> : vector<8xf32>
    %5 = vector.multi_reduction <add>, %4, %cst [1] : vector<8x256xf32> to vector<8xf32>
    %6 = vector.shape_cast %5 : vector<8xf32> to vector<8x1xf32>
    %7 = arith.addf %3, %6 : vector<8x1xf32>
    %c0_4 = arith.constant 0 : index
    %c0_5 = arith.constant 0 : index
    %8 = vector.load %arg12[%c0_4, %c0_5] : memref<8x1xf32, #tpu.memory_space<vmem>>, vector<8x1xf32>
    tpu.vector_store %arg12[%c0_4, %c0_5], %7 {strides = array<i32>} : memref<8x1xf32, #tpu.memory_space<vmem>>, vector<8x1xf32>,
    %c0_6 = arith.constant 0 : index
    %c0_7 = arith.constant 0 : index
    %9 = vector.load %arg13[%c0_6, %c0_7] : memref<8x1xf32, #tpu.memory_space<vmem>>, vector<8x1xf32>
    %c0_8 = arith.constant 0 : index
    %c0_9 = arith.constant 0 : index
    %10 = vector.load %arg3[%c0_8, %c0_9] : memref<8x256xf32, #tpu.memory_space<vmem>>, vector<8x256xf32>
    %cst_10 = arith.constant dense<0.000000e+00> : vector<8xf32>
    %11 = vector.multi_reduction <add>, %10, %cst_10 [1] : vector<8x256xf32> to vector<8xf32>
    %12 = vector.shape_cast %11 : vector<8xf32> to vector<8x1xf32>
    %13 = arith.addf %9, %12 : vector<8x1xf32>
    %c0_11 = arith.constant 0 : index
    %c0_12 = arith.constant 0 : index
    %14 = vector.load %arg13[%c0_11, %c0_12] : memref<8x1xf32, #tpu.memory_space<vmem>>, vector<8x1xf32>
    tpu.vector_store %arg13[%c0_11, %c0_12], %13 {strides = array<i32>} : memref<8x1xf32, #tpu.memory_space<vmem>>, vector<8x1xf32>,
    %c0_i32_13 = arith.constant 0 : i32
    %15 = arith.cmpi eq, %arg1, %c0_i32_13 : i32
    %16 = arith.extui %15 : i1 to i32
    %c0_i32_14 = arith.constant 0 : i32
    %17 = arith.cmpi ne, %16, %c0_i32_14 : i32
    scf.if %17 {
      %c0_15 = arith.constant 0 : index
      %c0_16 = arith.constant 0 : index
      %18 = vector.load %arg8[%c0_15, %c0_16] : memref<2x8xf32, #tpu.memory_space<vmem>>, vector<2x8xf32>
      %c0_17 = arith.constant 0 : index
      %c0_18 = arith.constant 0 : index
      %19 = vector.load %arg12[%c0_17, %c0_18] : memref<8x1xf32, #tpu.memory_space<vmem>>, vector<8x1xf32>
      %c0_19 = arith.constant 0 : index
      %c0_20 = arith.constant 0 : index
      %20 = vector.load %arg4[%c0_19, %c0_20] : memref<8x2xf32, #tpu.memory_space<vmem>>, vector<8x2xf32>
      %21 = vector.broadcast %19 : vector<8x1xf32> to vector<8x2xf32>
      %22 = arith.mulf %21, %20 : vector<8x2xf32>
      %cst_21 = arith.constant dense<0.000000e+00> : vector<2x2xf32>
      %23 = tpu.matmul %18, %22, %cst_21 {dimension_numbers = #tpu.dot_dimension_numbers<[1], [0], [0], [1], [0, 0, 1, 1], [], []>} : vector<2x8xf32>, vector<8x2xf32>, vector<2x2xf32> -> vector<2x2xf32>
      %c0_22 = arith.constant 0 : index
      %c0_23 = arith.constant 0 : index
      %24 = vector.load %arg6[%c0_22, %c0_23] : memref<1x2xf32, #tpu.memory_space<vmem>>, vector<1x2xf32>
      %25 = vector.broadcast %24 : vector<1x2xf32> to vector<2x2xf32>
      %26 = arith.addf %23, %25 : vector<2x2xf32>
      %c0_24 = arith.constant 0 : index
      %c0_25 = arith.constant 0 : index
      %27 = vector.load %arg8[%c0_24, %c0_25] : memref<2x8xf32, #tpu.memory_space<vmem>>, vector<2x8xf32>
      %c0_26 = arith.constant 0 : index
      %c0_27 = arith.constant 0 : index
      %28 = vector.load %arg13[%c0_26, %c0_27] : memref<8x1xf32, #tpu.memory_space<vmem>>, vector<8x1xf32>
      %c0_28 = arith.constant 0 : index
      %c0_29 = arith.constant 0 : index
      %29 = vector.load %arg5[%c0_28, %c0_29] : memref<8x2xf32, #tpu.memory_space<vmem>>, vector<8x2xf32>
      %30 = vector.broadcast %28 : vector<8x1xf32> to vector<8x2xf32>
      %31 = arith.mulf %30, %29 : vector<8x2xf32>
      %cst_30 = arith.constant dense<0.000000e+00> : vector<2x2xf32>
      %32 = tpu.matmul %27, %31, %cst_30 {dimension_numbers = #tpu.dot_dimension_numbers<[1], [0], [0], [1], [0, 0, 1, 1], [], []>} : vector<2x8xf32>, vector<8x2xf32>, vector<2x2xf32> -> vector<2x2xf32>
      %c0_31 = arith.constant 0 : index
      %c0_32 = arith.constant 0 : index
      %33 = vector.load %arg7[%c0_31, %c0_32] : memref<1x2xf32, #tpu.memory_space<vmem>>, vector<1x2xf32>
      %34 = vector.broadcast %33 : vector<1x2xf32> to vector<2x2xf32>
      %35 = arith.addf %32, %34 : vector<2x2xf32>
      %cst_33 = arith.constant 0.000000e+00 : f32
      %36 = vector.broadcast %cst_33 : f32 to vector<2x2xf32>
      %37 = arith.maximumf %26, %36 : vector<2x2xf32>
      %cst_34 = arith.constant 0.000000e+00 : f32
      %38 = vector.broadcast %cst_34 : f32 to vector<2x2xf32>
      %39 = arith.maximumf %35, %38 : vector<2x2xf32>
      %40 = vector.extract_strided_slice %37 {offsets = [0, 0], sizes = [2, 1], strides = [1, 1]} : vector<2x2xf32> to vector<2x1xf32>
      %c0_35 = arith.constant 0 : index
      %c0_36 = arith.constant 0 : index
      %41 = vector.load %arg9[%c0_35, %c0_36] : memref<4x2xf32, #tpu.memory_space<vmem>>, vector<1x2xf32>
      %42 = vector.broadcast %40 : vector<2x1xf32> to vector<2x2xf32>
      %43 = vector.broadcast %41 : vector<1x2xf32> to vector<2x2xf32>
      %44 = arith.mulf %42, %43 : vector<2x2xf32>
      %45 = vector.extract_strided_slice %37 {offsets = [0, 1], sizes = [2, 1], strides = [1, 1]} : vector<2x2xf32> to vector<2x1xf32>
      %c1 = arith.constant 1 : index
      %c0_37 = arith.constant 0 : index
      %46 = vector.load %arg9[%c1, %c0_37] : memref<4x2xf32, #tpu.memory_space<vmem>>, vector<1x2xf32>
      %47 = vector.broadcast %45 : vector<2x1xf32> to vector<2x2xf32>
      %48 = vector.broadcast %46 : vector<1x2xf32> to vector<2x2xf32>
      %49 = arith.mulf %47, %48 : vector<2x2xf32>
      %50 = arith.addf %44, %49 : vector<2x2xf32>
      %51 = vector.extract_strided_slice %39 {offsets = [0, 0], sizes = [2, 1], strides = [1, 1]} : vector<2x2xf32> to vector<2x1xf32>
      %c2 = arith.constant 2 : index
      %c0_38 = arith.constant 0 : index
      %52 = vector.load %arg9[%c2, %c0_38] : memref<4x2xf32, #tpu.memory_space<vmem>>, vector<1x2xf32>
      %53 = vector.broadcast %51 : vector<2x1xf32> to vector<2x2xf32>
      %54 = vector.broadcast %52 : vector<1x2xf32> to vector<2x2xf32>
      %55 = arith.mulf %53, %54 : vector<2x2xf32>
      %56 = arith.addf %50, %55 : vector<2x2xf32>
      %57 = vector.extract_strided_slice %39 {offsets = [0, 1], sizes = [2, 1], strides = [1, 1]} : vector<2x2xf32> to vector<2x1xf32>
      %c3 = arith.constant 3 : index
      %c0_39 = arith.constant 0 : index
      %58 = vector.load %arg9[%c3, %c0_39] : memref<4x2xf32, #tpu.memory_space<vmem>>, vector<1x2xf32>
      %59 = vector.broadcast %57 : vector<2x1xf32> to vector<2x2xf32>
      %60 = vector.broadcast %58 : vector<1x2xf32> to vector<2x2xf32>
      %61 = arith.mulf %59, %60 : vector<2x2xf32>
      %62 = arith.addf %56, %61 : vector<2x2xf32>
      %c0_40 = arith.constant 0 : index
      %c0_41 = arith.constant 0 : index
      %63 = vector.load %arg10[%c0_40, %c0_41] : memref<1x2xf32, #tpu.memory_space<vmem>>, vector<1x2xf32>
      %64 = vector.broadcast %63 : vector<1x2xf32> to vector<2x2xf32>
      %65 = arith.addf %62, %64 : vector<2x2xf32>
      %cst_42 = arith.constant dense<0xFF800000> : vector<2xf32>
      %66 = vector.multi_reduction <maximumf>, %65, %cst_42 [1] : vector<2x2xf32> to vector<2xf32>
      %67 = vector.shape_cast %66 : vector<2xf32> to vector<2x1xf32>
      %68 = vector.broadcast %67 : vector<2x1xf32> to vector<2x2xf32>
      %69 = arith.subf %65, %68 : vector<2x2xf32>
      %70 = math.exp %69 : vector<2x2xf32>
      %71 = vector.broadcast %67 : vector<2x1xf32> to vector<2x2xf32>
      %72 = arith.subf %65, %71 : vector<2x2xf32>
      %cst_43 = arith.constant dense<0.000000e+00> : vector<2xf32>
      %73 = vector.multi_reduction <add>, %70, %cst_43 [1] : vector<2x2xf32> to vector<2xf32>
      %74 = vector.shape_cast %73 : vector<2xf32> to vector<2x1xf32>
      %75 = math.log %74 : vector<2x1xf32>
      %76 = vector.broadcast %75 : vector<2x1xf32> to vector<2x2xf32>
      %77 = arith.subf %72, %76 : vector<2x2xf32>
      %c0_44 = arith.constant 0 : index
      %c0_45 = arith.constant 0 : index
      %78 = vector.load %arg11[%c0_44, %c0_45] : memref<2x2xf32, #tpu.memory_space<vmem>>, vector<2x2xf32>
      tpu.vector_store %arg11[%c0_44, %c0_45], %77 {strides = array<i32>} : memref<2x2xf32, #tpu.memory_space<vmem>>, vector<2x2xf32>,
    } else {
    }
    return
  }
  func.func @transform_0(%arg0: i32, %arg1: i32) -> (i32, i32) {
    %c0_i32 = arith.constant 0 : i32
    return %arg0, %arg1 : i32, i32
  }
  func.func @transform_1(%arg0: i32, %arg1: i32) -> (i32, i32) {
    %c0_i32 = arith.constant 0 : i32
    return %arg0, %arg1 : i32, i32
  }
  func.func @transform_2(%arg0: i32, %arg1: i32) -> (i32, i32) {
    %c0_i32 = arith.constant 0 : i32
    %c0_i32_0 = arith.constant 0 : i32
    %c0_i32_1 = arith.constant 0 : i32
    return %c0_i32, %c0_i32_0 : i32, i32
  }
  func.func @transform_3(%arg0: i32, %arg1: i32) -> (i32, i32) {
    %c0_i32 = arith.constant 0 : i32
    %c0_i32_0 = arith.constant 0 : i32
    %c0_i32_1 = arith.constant 0 : i32
    return %c0_i32, %c0_i32_0 : i32, i32
  }
  func.func @transform_4(%arg0: i32, %arg1: i32) -> (i32, i32) {
    %c0_i32 = arith.constant 0 : i32
    %c0_i32_0 = arith.constant 0 : i32
    %c0_i32_1 = arith.constant 0 : i32
    return %c0_i32, %c0_i32_0 : i32, i32
  }
  func.func @transform_5(%arg0: i32, %arg1: i32) -> (i32, i32) {
    %c0_i32 = arith.constant 0 : i32
    %c0_i32_0 = arith.constant 0 : i32
    %c0_i32_1 = arith.constant 0 : i32
    return %c0_i32, %c0_i32_0 : i32, i32
  }
  func.func @transform_6(%arg0: i32, %arg1: i32) -> (i32, i32) {
    %c0_i32 = arith.constant 0 : i32
    %c0_i32_0 = arith.constant 0 : i32
    %c0_i32_1 = arith.constant 0 : i32
    return %c0_i32, %c0_i32_0 : i32, i32
  }
  func.func @transform_7(%arg0: i32, %arg1: i32) -> (i32, i32) {
    %c0_i32 = arith.constant 0 : i32
    %c0_i32_0 = arith.constant 0 : i32
    %c0_i32_1 = arith.constant 0 : i32
    return %c0_i32, %c0_i32_0 : i32, i32
  }
  func.func @transform_8(%arg0: i32, %arg1: i32) -> (i32, i32) {
    %c0_i32 = arith.constant 0 : i32
    %c0_i32_0 = arith.constant 0 : i32
    %c0_i32_1 = arith.constant 0 : i32
    return %c0_i32, %c0_i32_0 : i32, i32
  }
  func.func @transform_9(%arg0: i32, %arg1: i32) -> (i32, i32) {
    %c0_i32 = arith.constant 0 : i32
    %c0_i32_0 = arith.constant 0 : i32
    return %arg0, %c0_i32 : i32, i32
  }
}

</mosaic_0001>

<llo_original>
// kernel: tpu_custom_call.1
$region0: #{tpu_custom_call.1}
  #allocation0 [shape = 'u32[]', space=smem, size = 0x4, offset = 0x4, fixed_abs, tag = 'smem constant byte address 0x4 - core index']
  #allocation1 [shape = 'u32[72,128]{1,0:T(1,128)}', space=vmem, size = 0x9000, scoped, tag = 'internal scratch']
  #allocation2 [shape = 'f32[8,1]{1,0:T(8,128)}', space=vmem, size = 0x1000, scoped, tag = 'scratch operand']
  #allocation3 [shape = 'f32[8,1]{1,0:T(8,128)}', space=vmem, size = 0x1000, scoped, tag = 'scratch operand']
  %s0 = inlined_call_operand.vmem [shape: f32[8,256], index: 0, kind: input, shape index: {}]
  %s1 = inlined_call_operand.hbm [shape: f32[8,256], index: 1, kind: input, shape index: {}]
  %s2 = inlined_call_operand.vmem [shape: f32[8,2], index: 2, kind: input, shape index: {}]
  %s3 = inlined_call_operand.vmem [shape: f32[8,2], index: 3, kind: input, shape index: {}]
  %s4 = inlined_call_operand.vmem [shape: f32[1,2], index: 4, kind: input, shape index: {}]
  %s5 = inlined_call_operand.vmem [shape: f32[1,2], index: 5, kind: input, shape index: {}]
  %s6 = inlined_call_operand.vmem [shape: f32[2,8], index: 6, kind: input, shape index: {}]
  %s7 = inlined_call_operand.vmem [shape: f32[4,2], index: 7, kind: input, shape index: {}]
  %s8 = inlined_call_operand.vmem [shape: f32[1,2], index: 8, kind: input, shape index: {}]
  %s9 = inlined_call_operand.hbm [shape: f32[2,2], index: 9, kind: output, shape index: {}]
  %s10 = sld [smem:[#allocation0]]
  $region58: #{tpu_custom_call.1} parent=0
    _
  %s12 = ssub.s32 1, %s10
  %s13 = scalar_select 0, %s12, %s10
  $region1: #{tpu_custom_call.1} parent=0
    #allocation4 [shape = 'u8[8192]{0}', space=vmem, size = 0x2000, scoped, tag = 'input window, operand 1, single buffered']
    #allocation5 [shape = 's32[1]{0}', space=sflag, size = 0x4, scoped, tag = 'scoped memory for tpu_custom_call.1']
    #allocation6 [shape = 's32[1]{0}', space=sflag, size = 0x4, scoped, tag = 'scoped memory for tpu_custom_call.1']
    #allocation7 [shape = 'u8[1024]{0}', space=vmem, size = 0x400, scoped, tag = 'output window, operand 0, single buffered']
    %14 = vsyncpa [#allocation5], 0
    %15 = vsyncpa [#allocation6], 0
    // Predicated region
    $region2: #{tpu_custom_call.1} parent=1 // pred_check
      _
    $region3: #{tpu_custom_call.1} parent=1 // pred_check_branch
      %17 = sbr.rel (0) target = $region5
    $region4: #{tpu_custom_call.1} parent=1 // pred_region
      _
    $region5: #{tpu_custom_call.1} parent=1 // pred_fallthru
      _
    // Predicated region
    $region6: #{tpu_custom_call.1} parent=1 // pred_check
      _
    $region7: #{tpu_custom_call.1} parent=1 // pred_check_branch
      %19 = sbr.rel (0) target = $region9
    $region8: #{tpu_custom_call.1} parent=1 // pred_region
      %21 = vsyncadd [#allocation5], 0
      %s23 = sshll.u32 %s1, 4
      %s24 = int_to_ptr.hbm [resolvable:$true] %s23
      %s25 = sshll.u32 [#allocation4], 4
      %s26 = int_to_ptr.vmem [resolvable:$true] %s25
      %28 = dma.hbm_to_vmem [thread:$0]  %s24, 256, %s26, [#allocation5]
    $region9: #{tpu_custom_call.1} parent=1 // pred_fallthru
      _
    // Predicated region
    $region10: #{tpu_custom_call.1} parent=1 // pred_check
      _
    $region11: #{tpu_custom_call.1} parent=1 // pred_check_branch
      %30 = sbr.rel (0) target = $region13
    $region12: #{tpu_custom_call.1} parent=1 // pred_region
      _
    $region13: #{tpu_custom_call.1} parent=1 // pred_fallthru
      _
    // Predicated region
    $region14: #{tpu_custom_call.1} parent=1 // pred_check
      _
    $region15: #{tpu_custom_call.1} parent=1 // pred_check_branch
      %32 = sbr.rel (0) target = $region17
    $region16: #{tpu_custom_call.1} parent=1 // pred_region
      _
    $region17: #{tpu_custom_call.1} parent=1 // pred_fallthru
      _
    // Predicated region
    $region18: #{tpu_custom_call.1} parent=1 // pred_check
      _
    $region19: #{tpu_custom_call.1} parent=1 // pred_check_branch
      %34 = sbr.rel (0) target = $region21
    $region20: #{tpu_custom_call.1} parent=1 // pred_region
      _
    $region21: #{tpu_custom_call.1} parent=1 // pred_fallthru
      _
    // Predicated region
    $region22: #{tpu_custom_call.1} parent=1 // pred_check
      _
    $region23: #{tpu_custom_call.1} parent=1 // pred_check_branch
      %36 = sbr.rel (0) target = $region25
    $region24: #{tpu_custom_call.1} parent=1 // pred_region
      _
    $region25: #{tpu_custom_call.1} parent=1 // pred_fallthru
      _
    // Predicated region
    $region26: #{tpu_custom_call.1} parent=1 // pred_check
      _
    $region27: #{tpu_custom_call.1} parent=1 // pred_check_branch
      %38 = sbr.rel (0) target = $region29
    $region28: #{tpu_custom_call.1} parent=1 // pred_region
      _
    $region29: #{tpu_custom_call.1} parent=1 // pred_fallthru
      _
    // Predicated region
    $region30: #{tpu_custom_call.1} parent=1 // pred_check
      _
    $region31: #{tpu_custom_call.1} parent=1 // pred_check_branch
      %40 = sbr.rel (0) target = $region33
    $region32: #{tpu_custom_call.1} parent=1 // pred_region
      _
    $region33: #{tpu_custom_call.1} parent=1 // pred_fallthru
      _
    // Predicated region
    $region34: #{tpu_custom_call.1} parent=1 // pred_check
      _
    $region35: #{tpu_custom_call.1} parent=1 // pred_check_branch
      %42 = sbr.rel (0) target = $region37
    $region36: #{tpu_custom_call.1} parent=1 // pred_region
      _
    $region37: #{tpu_custom_call.1} parent=1 // pred_fallthru
      _
    // Predicated region
    $region38: #{tpu_custom_call.1} parent=1 // pred_check
      _
    $region39: #{tpu_custom_call.1} parent=1 // pred_check_branch
      %44 = sbr.rel (0) target = $region41
    $region40: #{tpu_custom_call.1} parent=1 // pred_region
      %46 = dma.done [#allocation5], 256
    $region41: #{tpu_custom_call.1} parent=1 // pred_fallthru
      _
    %p47 = scmp.eq.s32.totalorder 0, 0
    // Predicated region
    $region42: #{tpu_custom_call.1} parent=1 // pred_check
      %p48 = pneg %p47
    $region43: #{tpu_custom_call.1} parent=1 // pred_check_branch
      %50 = sbr.rel (%p48) target = $region45
    $region44: #{tpu_custom_call.1} parent=1 // pred_region
      %vm51 = vcmask 7168
      %52 = vst.msk [vmem:[#allocation2] sm:$0xff] %vm51, 0.0
      %53 = vst.msk [vmem:[#allocation3] sm:$0xff] %vm51, 0.0
    $region45: #{tpu_custom_call.1} parent=1 // pred_fallthru
      _
    %v54 = vld [vmem:[#allocation2] sm:$0xff]
    %v55 = vld [vmem:[%s0] sm:$0xff]
    %v56 = vld [vmem:[%s0 + $0x8] sm:$0xff]
    %v57 = vadd.f32 %v55, %v56
    %58 = vadd.xlane.f32.xlu0 %v57
    %v59 = vpop.xlane.xlu0 %58
    %v60 = vadd.f32 %v54, %v59
    %vm61 = vcmask 7168
    %62 = vst.msk [vmem:[#allocation2] sm:$0xff] %vm61, %v60
    %v63 = vld [vmem:[#allocation3] sm:$0xff]
    %v64 = vld [vmem:[#allocation4] sm:$0xff]
    %v65 = vld [vmem:[#allocation4 + $0x8] sm:$0xff]
    %v66 = vadd.f32 %v64, %v65
    %67 = vadd.xlane.f32.xlu0 %v66
    %v68 = vpop.xlane.xlu0 %67
    %v69 = vadd.f32 %v63, %v68
    %70 = vst.msk [vmem:[#allocation3] sm:$0xff] %vm61, %v69
    // Predicated region
    $region46: #{tpu_custom_call.1} parent=1 // pred_check
      %p71 = pneg %p47
    $region47: #{tpu_custom_call.1} parent=1 // pred_check_branch
      %73 = sbr.rel (%p71) target = $region49
    $region48: #{tpu_custom_call.1} parent=1 // pred_region
      %v74 = vld [vmem:[%s6] sm:$0x3]
      %v75 = vld [vmem:[#allocation2] sm:$0xff]
      %v76 = vld [vmem:[%s2] sm:$0xff]
      %78 = vset.pattern.permute.xlu0 0
      %79 = vperm.xlu0 %78, %v75
      %v80 = vpop.permute.xlu0 %79
      %v82 = vmul.f32 %v80, %v76
      %v83 = vld [vmem:[%s4] sm:$0x1]
      %v85 = vperm.slane %v83, 0
      %vm87 = vcmask 64512
      %v89 = vsel %vm87, %v74, 0
      %91 = vmatpush.msra.mxu0 0.0
      %92 = vmatpush.msra.mxu0 0.0
      %93 = vmatpush.msra.mxu0 0.0
      %94 = vmatpush.msra.mxu0 0.0
      %95 = vmatpush.msra.mxu0 0.0
      %96 = vmatpush.msra.mxu0 0.0
      %97 = vmatpush.msra.mxu0 0.0
      %98 = vmatpush.msra.mxu0 0.0
      %99 = vmatpush.msra.mxu0 0.0
      %100 = vmatpush.msra.mxu0 0.0
      %101 = vmatpush.msra.mxu0 0.0
      %102 = vmatpush.msra.mxu0 0.0
      %103 = vmatpush.msra.mxu0 0.0
      %104 = vmatpush.msra.mxu0 0.0
      %105 = vmatpush.msra.mxu0 0.0
      %106 = vmatpush.msra.mxu0 %v82
      %107 = vmatmul.f32.gmra.mxu0 %v89
      %v108 = vpop.f32.mrf.mxu0
      %v109 = vadd.f32 %v85, %v108
      %110 = vdwg.mxu0
      %v111 = vld [vmem:[#allocation3] sm:$0xff]
      %v112 = vld [vmem:[%s3] sm:$0xff]
      %114 = vset.pattern.permute.xlu0 0
      %115 = vperm.xlu0 %114, %v111
      %v116 = vpop.permute.xlu0 %115
      %v118 = vmul.f32 %v116, %v112
      %v119 = vld [vmem:[%s5] sm:$0x1]
      %v121 = vperm.slane %v119, 0
      %123 = vmatpush.msra.mxu0 0.0
      %124 = vmatpush.msra.mxu0 0.0
      %125 = vmatpush.msra.mxu0 0.0
      %126 = vmatpush.msra.mxu0 0.0
      %127 = vmatpush.msra.mxu0 0.0
      %128 = vmatpush.msra.mxu0 0.0
      %129 = vmatpush.msra.mxu0 0.0
      %130 = vmatpush.msra.mxu0 0.0
      %131 = vmatpush.msra.mxu0 0.0
      %132 = vmatpush.msra.mxu0 0.0
      %133 = vmatpush.msra.mxu0 0.0
      %134 = vmatpush.msra.mxu0 0.0
      %135 = vmatpush.msra.mxu0 0.0
      %136 = vmatpush.msra.mxu0 0.0
      %137 = vmatpush.msra.mxu0 0.0
      %138 = vmatpush.msra.mxu0 %v118
      %139 = vmatmul.f32.gmra.mxu0 %v89
      %v140 = vpop.f32.mrf.mxu0
      %v141 = vadd.f32 %v121, %v140
      %142 = vdwg.mxu0
      %v143 = vmax.f32 %v109, 0.0
      %v144 = vmax.f32 %v141, 0.0
      %v145 = vld [vmem:[%s7] sm:$0x1]
      %147 = vset.pattern.permute.xlu0 0
      %148 = vperm.xlu0 %147, %v143
      %v149 = vpop.permute.xlu0 %148
      %v151 = vperm.slane %v145, 0
      %v152 = vmul.f32 %v149, %v151
      %v153 = vld [vmem:[%s7 + $0x1] sm:$0x1]
      %154 = vset.pattern.permute.xlu0 1
      %155 = vperm.xlu0 %154, %v143
      %v156 = vpop.permute.xlu0 %155
      %v158 = vperm.slane %v153, 0
      %v159 = vmul.f32 %v156, %v158
      %v160 = vadd.f32 %v152, %v159
      %v161 = vld [vmem:[%s7 + $0x2] sm:$0x1]
      %163 = vset.pattern.permute.xlu0 0
      %164 = vperm.xlu0 %163, %v144
      %v165 = vpop.permute.xlu0 %164
      %v167 = vperm.slane %v161, 0
      %v168 = vmul.f32 %v165, %v167
      %v169 = vadd.f32 %v160, %v168
      %v170 = vld [vmem:[%s7 + $0x3] sm:$0x1]
      %171 = vset.pattern.permute.xlu0 1
      %172 = vperm.xlu0 %171, %v144
      %v173 = vpop.permute.xlu0 %172
      %v175 = vperm.slane %v170, 0
      %v176 = vmul.f32 %v173, %v175
      %v177 = vadd.f32 %v169, %v176
      %v178 = vld [vmem:[%s8] sm:$0x1]
      %v180 = vperm.slane %v178, 0
      %v182 = vadd.f32 %v177, %v180
      %vm183 = vcmask 9216
      %v184 = vsel %vm183, %v182, -inf
      %185 = vmax.xlane.f32.xlu0 %v184
      %v186 = vpop.xlane.xlu0 %185
      %v187 = vsub.f32 %v182, %v186
      %v188 = vmul.f32 %v187, 1.442695
      %v189 = vpow.pop %v188
      %v190 = vsel %vm183, %v189, 0.0
      %191 = vadd.xlane.f32.xlu0 %v190
      %v192 = vpop.xlane.xlu0 %191
      %v193 = vlog2.pop %v192
      %v194 = vmul.f32 %v193, 0.6931472
      %v195 = vsub.f32 %v187, %v194
      %196 = vst.msk [vmem:[#allocation7] sm:$0x3] %vm183, %v195
    $region49: #{tpu_custom_call.1} parent=1 // pred_fallthru
      _
    // Predicated region
    $region50: #{tpu_custom_call.1} parent=1 // pred_check
      _
    $region51: #{tpu_custom_call.1} parent=1 // pred_check_branch
      %198 = sbr.rel (0) target = $region53
    $region52: #{tpu_custom_call.1} parent=1 // pred_region
      %200 = vsyncadd [#allocation6], 0
      %s202 = sshll.u32 [#allocation7], 4
      %s203 = int_to_ptr.vmem [resolvable:$true] %s202
      %s204 = sshll.u32 %s9, 4
      %s205 = int_to_ptr.hbm [resolvable:$true] %s204
      %207 = dma.vmem_to_hbm [thread:$0]  %s203, 32, %s205, [#allocation6]
    $region53: #{tpu_custom_call.1} parent=1 // pred_fallthru
      _
    // Predicated region
    $region54: #{tpu_custom_call.1} parent=1 // pred_check
      _
    $region55: #{tpu_custom_call.1} parent=1 // pred_check_branch
      %209 = sbr.rel (0) target = $region57
    $region56: #{tpu_custom_call.1} parent=1 // pred_region
      %211 = dma.done [#allocation6], 32
    $region57: #{tpu_custom_call.1} parent=1 // pred_fallthru
      _
    %212 = vsyncpa [#allocation5], 1
    %213 = vsyncpa [#allocation6], 1

</llo_original>
